<compile_context>
chip_gen: v6e
topology: v6e:2x2x1
jax: 0.10.0
libtpu: 0.0.40
codegen_flags: <defaults>
</compile_context>

<pallas_src>
import functools

import jax
import jax.numpy as jnp
from jax.experimental import pallas as pl
from jax.experimental.pallas import tpu as pltpu

_LN_EPS = 1e-5                 # torch.nn.LayerNorm default
_ACT_DTYPE = jnp.bfloat16      # inter-kernel activation storage dtype


def _gelu(x):
    # TODO(synk): PyTorch nn.GELU() defaults to the exact erf formulation; the tanh
    # approximation is used because erf lowering inside Mosaic is not guaranteed.
    return jax.nn.gelu(x, approximate=True)


def _layernorm(x, g, b, axis):
    mu = jnp.mean(x, axis=axis, keepdims=True)
    var = jnp.mean(jnp.square(x - mu), axis=axis, keepdims=True)
    return (x - mu) * jax.lax.rsqrt(var + _LN_EPS) * g + b


def _round_up(x, m):
    return (x + m - 1) // m * m


def _itemsize(dt):
    return jnp.dtype(dt).itemsize


def _vmem_limit_bytes():
    # Generation-aware scoped-VMEM budget (v5e/v6e: 128 MiB physical, v7x: 64 MiB).
    try:
        cap = int(pltpu.get_tpu_info().vmem_capacity_bytes)
    except Exception:
        cap = 128 * 1024 * 1024
    return int(min(cap * 3 // 4, 100 * 1024 * 1024))


def _single_buffer_kw():
    # Single-buffer weight BlockSpecs whose block index is (nearly) constant: halves their
    # VMEM footprint (matters on v7x's 64 MiB); only exposed DMA is per-camera transitions.
    if hasattr(pl, "Buffered"):
        return {"pipeline_mode": pl.Buffered(1)}
    return {}


def _pick_spatial_tile(S, per_col_bytes, budget_bytes, max_tile=None):
    """Largest divisor of S that is a multiple of 128 and fits the byte budget.
    S is always a multiple of 128 here (the wrapper pads), so 128 is always a candidate."""
    cands = [d for d in range(128, S + 1, 128) if S % d == 0] or [S]
    if max_tile is not None:
        cands = [d for d in cands if d <= max_tile] or [min(cands)]
    fits = [d for d in cands if d * per_col_bytes <= budget_bytes]
    return max(fits) if fits else min(cands)


def _pick_row_tile(C, per_row_bytes, budget_bytes):
    """Largest divisor of C, preferring multiples of 16 (bf16 sublane packing)."""
    cands = [d for d in range(16, C + 1, 16) if C % d == 0]
    if not cands:
        cands = [d for d in range(8, C + 1, 8) if C % d == 0]
    cands = cands or [C]
    fits = [d for d in cands if d * per_row_bytes <= budget_bytes]
    return max(fits) if fits else min(cands)


# ----------------------------------------------------------------------------
# ViewProjectionModule: Linear(S->Hd) -> GELU -> Linear(Hd->S) over the flattened
# spatial dim, one private MLP per camera.  Grid: (camera, B*L, C-tiles); camera is
# outermost so the (already bf16, single-buffered) weights stay resident in VMEM.
# TODO(synk): if the VPM is compute-bound (very large Hd), also fold B*L into the
# matmul rows; at typical Hd the layer is HBM-bound so tiling/bf16 storage dominate.
# ----------------------------------------------------------------------------
def _vpm_kernel(x_ref, w1_ref, b1_ref, w2_ref, b2_ref, o_ref):
    # x: (tC, S)   w1: (S, Hd) bf16   b1: (1, Hd)   w2: (Hd, S) bf16   b2: (1, S)
    x = x_ref[...].astype(jnp.bfloat16)
    h = jnp.dot(x, w1_ref[...], preferred_element_type=jnp.float32) + b1_ref[...]
    h = _gelu(h)
    y = jnp.dot(h.astype(jnp.bfloat16), w2_ref[...],
                preferred_element_type=jnp.float32) + b2_ref[...]
    o_ref[...] = y.astype(o_ref.dtype)


def vpm_layer(xa, w1, b1, w2, b2, *, out_dtype):
    # xa: (BL, M, C, S)   w1: (M, S, Hd) bf16   b1: (M, 1, Hd)   w2: (M, Hd, S) bf16
    BL, M, C, S = xa.shape
    Hd = w1.shape[-1]
    limit = _vmem_limit_bytes()
    in_b, out_b = _itemsize(xa.dtype), _itemsize(out_dtype)
    fixed = 2 * (S * Hd + Hd * S) + 4 * (Hd + S) + (1 << 20)      # bf16 weights (1 buf) + bias
    # per row of tC: 2x double-buffered in/out blocks + bf16 copy + f32 result + (row,Hd) temps
    per_row = S * (2 * in_b + 2 * out_b + 2 + 4) + Hd * (4 + 2 + 4)
    tC = _pick_row_tile(C, per_row, int(limit * 0.8) - fixed)
    single = _single_buffer_kw()
    return pl.pallas_call(
        _vpm_kernel,
        out_shape=jax.ShapeDtypeStruct((BL, M, C, S), out_dtype),
        grid=(M, BL, C // tC),
        in_specs=[
            pl.BlockSpec((None, None, tC, S), lambda m, r, c: (r, m, c, 0)),
            pl.BlockSpec((None, S, Hd), lambda m, r, c: (m, 0, 0), **single),
            pl.BlockSpec((None, 1, Hd), lambda m, r, c: (m, 0, 0)),
            pl.BlockSpec((None, Hd, S), lambda m, r, c: (m, 0, 0), **single),
            pl.BlockSpec((None, 1, S), lambda m, r, c: (m, 0, 0)),
        ],
        out_specs=pl.BlockSpec((None, None, tC, S), lambda m, r, c: (r, m, c, 0)),
        compiler_params=pltpu.CompilerParams(
            dimension_semantics=("parallel", "parallel", "parallel"),
            vmem_limit_bytes=limit),
    )(xa, w1, b1, w2, b2)


# ----------------------------------------------------------------------------
# One VAM transformer layer (PreNorm attention over the M views + PreNorm FFN) on
# channel-major (C, tS) tiles, with an optional fused mean over the views.
# ----------------------------------------------------------------------------
def _vam_kernel(x_ref, ln1g_ref, ln1b_ref, wqkv_ref, wo_ref, bo_ref,
                ln2g_ref, ln2b_ref, w1_ref, b1_ref, w2_ref, b2_ref,
                o_ref, *, num_views, heads, dim_head, fuse_mean):
    M = num_views
    inner = heads * dim_head
    T = x_ref.shape[-1]

    # Hoisted params; weights arrive already bf16 (pre-cast once in prepare_params).
    ln1g = ln1g_ref[...]; ln1b = ln1b_ref[...]          # (C, 1)
    ln2g = ln2g_ref[...]; ln2b = ln2b_ref[...]          # (C, 1)
    bo = bo_ref[...]; b1 = b1_ref[...]; b2 = b2_ref[...]
    wqkv = wqkv_ref[...]                                # (3*inner, C) bf16, q rows pre-scaled
    wo = wo_ref[...]                                    # (C, inner)   bf16
    w1 = w1_ref[...]                                    # (mlp, C)     bf16
    w2 = w2_ref[...]                                    # (C, mlp)     bf16

    # PreNorm(LN1) over channels, batched over all M views.
    x = x_ref[...].astype(jnp.float32)                  # (M, C, T)
    y = _layernorm(x, ln1g, ln1b, axis=1).astype(jnp.bfloat16)

    # Fused QKV: ONE matmul for all views (views concatenated along the lane axis).
    ycat = jnp.concatenate([y[m] for m in range(M)], axis=-1)       # (C, M*T)
    qkv = jnp.dot(wqkv, ycat, preferred_element_type=jnp.float32)   # (3*inner, M*T)

    qs, ks, vs = [], [], []
    for m in range(M):
        blk = qkv[:, m * T:(m + 1) * T]
        qs.append(blk[0 * inner:1 * inner].reshape(heads, dim_head, T))
        ks.append(blk[1 * inner:2 * inner].reshape(heads, dim_head, T))
        vs.append(blk[2 * inner:3 * inner].reshape(heads, dim_head, T))

    acc = None
    for i in range(M):
        # Per-head scores vs every view j: sublane reduce over dim_head (VPU+XLU, no MXU).
        s = [jnp.sum(qs[i] * ks[j], axis=1, keepdims=True) for j in range(M)]  # (heads,1,T)
        mx = s[0]
        for j in range(1, M):
            mx = jnp.maximum(mx, s[j])
        es = [jnp.exp(sj - mx) for sj in s]
        den = es[0]
        for j in range(1, M):
            den = den + es[j]
        inv = pl.reciprocal(den, approx=True)            # EUP slot, ~free

        # Weighted sum of values: per-head softmax weight broadcast over dim_head (VPU).
        att = (es[0] * inv) * vs[0]
        for j in range(1, M):
            att = att + (es[j] * inv) * vs[j]

        # Fused to_out over all heads + attention residual.
        out_i = jnp.dot(wo, att.reshape(inner, T).astype(jnp.bfloat16),
                        preferred_element_type=jnp.float32) + bo    # (C, T)
        xi = x_ref[i].astype(jnp.float32) + out_i

        # PreNorm(LN2) + FeedForward + residual.  (Kept per-view so each view's result can
        # be consumed immediately below instead of keeping M live (C, T) buffers.)
        y2 = _layernorm(xi, ln2g, ln2b, axis=0).astype(jnp.bfloat16)
        h1 = _gelu(jnp.dot(w1, y2, preferred_element_type=jnp.float32) + b1)
        ff = jnp.dot(w2, h1.astype(jnp.bfloat16), preferred_element_type=jnp.float32) + b2
        xo = xi + ff

        if fuse_mean:
            acc = xo if acc is None else acc + xo         # in-loop mean accumulation
        else:
            o_ref[i] = xo.astype(o_ref.dtype)

    if fuse_mean:
        o_ref[...] = (acc * (1.0 / M)).astype(o_ref.dtype)


def vam_layer(xa, vp, *, heads, dim_head, fuse_mean, out_dtype):
    BL, M, C, S = xa.shape
    inner = heads * dim_head
    mlp = vp["ff_w1"].shape[0]

    limit = _vmem_limit_bytes()
    in_b, out_b = _itemsize(xa.dtype), _itemsize(out_dtype)
    # fixed: single-buffered bf16 weights + small LN/bias params + headroom
    fixed = 2 * (3 * inner * C + inner * C + 2 * mlp * C) + 4 * (8 * C + 2 * mlp) + (2 << 20)
    # per spatial column: double-buffered in/out blocks, f32 LN temp, bf16 view-concat,
    # f32 fused qkv (lives across the view loop), and per-view attention/FFN temporaries.
    per_col = (2 * M * C * in_b
               + 2 * (C if fuse_mean else M * C) * out_b
               + 4 * M * C + 2 * 2 * M * C
               + 4 * 3 * M * inner
               + 4 * (3 * inner + 2 * mlp + 4 * C + 4 * M * heads))
    budget = int(limit * 0.8) - fixed
    tS = _pick_spatial_tile(S, per_col, budget)
    # Megacore balance: keep at least 2 grid steps so a 2-TC chip (v7x) is not half idle.
    if BL * (S // tS) < 2 and S >= 256:
        tS = _pick_spatial_tile(S, per_col, budget, max_tile=S // 2)

    kernel = functools.partial(_vam_kernel, num_views=M, heads=heads,
                               dim_head=dim_head, fuse_mean=fuse_mean)
    single = _single_buffer_kw()

    def const(arr, **kw):
        nd = arr.ndim
        return pl.BlockSpec(arr.shape, lambda b, s, _nd=nd: (0,) * _nd, **kw)

    in_specs = [
        pl.BlockSpec((None, M, C, tS), lambda b, s: (b, 0, 0, s)),
        const(vp["ln1_g"]), const(vp["ln1_b"]),
        const(vp["wqkv"], **single), const(vp["wo"], **single), const(vp["bo"]),
        const(vp["ln2_g"]), const(vp["ln2_b"]),
        const(vp["ff_w1"], **single), const(vp["ff_b1"]),
        const(vp["ff_w2"], **single), const(vp["ff_b2"]),
    ]
    if fuse_mean:
        out_shape = jax.ShapeDtypeStruct((BL, C, S), out_dtype)
        out_spec = pl.BlockSpec((None, C, tS), lambda b, s: (b, 0, s))
    else:
        out_shape = jax.ShapeDtypeStruct((BL, M, C, S), out_dtype)
        out_spec = pl.BlockSpec((None, M, C, tS), lambda b, s: (b, 0, 0, s))

    return pl.pallas_call(
        kernel,
        out_shape=out_shape,
        grid=(BL, S // tS),
        in_specs=in_specs,
        out_specs=out_spec,
        compiler_params=pltpu.CompilerParams(
            dimension_semantics=("parallel", "parallel"),
            vmem_limit_bytes=limit),
    )(xa, vp["ln1_g"], vp["ln1_b"], vp["wqkv"], vp["wo"], vp["bo"],
      vp["ln2_g"], vp["ln2_b"], vp["ff_w1"], vp["ff_b1"], vp["ff_w2"], vp["ff_b2"])


# ----------------------------------------------------------------------------
# Mean over the M views (only used when vam_depth == 0; otherwise the mean is fused
# into the last VAM layer's epilogue).
# ----------------------------------------------------------------------------
def _mean_kernel(x_ref, o_ref):
    o_ref[...] = jnp.mean(x_ref[...].astype(jnp.float32), axis=0).astype(o_ref.dtype)


def mean_over_views(xa, *, out_dtype):
    BL, M, C, S = xa.shape
    limit = _vmem_limit_bytes()
    in_b, out_b = _itemsize(xa.dtype), _itemsize(out_dtype)
    per_col = 2 * M * C * in_b + 2 * C * out_b + 4 * (M * C + C)
    tS = _pick_spatial_tile(S, per_col, int(limit * 0.8))
    return pl.pallas_call(
        _mean_kernel,
        out_shape=jax.ShapeDtypeStruct((BL, C, S), out_dtype),
        grid=(BL, S // tS),
        in_specs=[pl.BlockSpec((None, M, C, tS), lambda b, s: (b, 0, 0, s))],
        out_specs=pl.BlockSpec((None, C, tS), lambda b, s: (b, 0, s)),
        compiler_params=pltpu.CompilerParams(
            dimension_semantics=("parallel", "parallel"),
            vmem_limit_bytes=limit),
    )(xa)


# ----------------------------------------------------------------------------
# Full forward pass.  Only free reshapes + (optional) zero padding of the spatial dim
# happen outside the kernels; no HBM transposes.
# ----------------------------------------------------------------------------
def view_transfer_forward(x, prepared):
    B, L, M, C, H, W = x.shape
    S = H * W
    S_pad = prepared["spatial_pad"]
    xa = x.reshape(B * L, M, C, S)
    if S_pad != S:
        xa = jnp.pad(xa, ((0, 0), (0, 0), (0, 0), (0, S_pad - S)))

    for (w1, b1, w2, b2) in prepared["vpm"]:
        xa = vpm_layer(xa, w1, b1, w2, b2, out_dtype=_ACT_DTYPE)

    vam = prepared["vam"]
    if vam:
        for li, vp in enumerate(vam):
            last = li == len(vam) - 1
            xa = vam_layer(xa, vp, heads=prepared["heads"], dim_head=prepared["dim_head"],
                           fuse_mean=last,
                           out_dtype=jnp.float32 if last else _ACT_DTYPE)
        out = xa                                  # (BL, C, S_pad) after fused mean
    else:
        out = mean_over_views(xa, out_dtype=jnp.float32)

    if S_pad != S:
        out = out[:, :, :S]
    return out.reshape(B, L, C, H, W)


# ----------------------------------------------------------------------------
# Deterministic synthetic params in the PyTorch orientation, plus a one-time
# prepare step (bf16 cast, spatial zero-padding, attention scale folded into wqkv).
# ----------------------------------------------------------------------------
def init_params(key, *, input_dim, spatial_dim, hidden_dim, num_cam, vpm_depth,
                heads, dim_head, vam_depth, mlp_dim):
    inner = heads * dim_head
    C = input_dim
    keys = iter(jax.random.split(key, 4 + 4 * vpm_depth + 11 * vam_depth))

    def nrm(shape, s=0.1):
        return (s * jax.random.normal(next(keys), shape)).astype(jnp.float32)

    params = {"heads": heads, "dim_head": dim_head, "spatial_dim": spatial_dim,
              "vpm": [], "vam": []}
    for _ in range(vpm_depth):
        params["vpm"].append(dict(
            w1=nrm((num_cam, spatial_dim, hidden_dim)),   # Linear(S->Hd).weight^T per camera
            b1=nrm((num_cam, 1, hidden_dim)),
            w2=nrm((num_cam, hidden_dim, spatial_dim)),   # Linear(Hd->S).weight^T per camera
            b2=nrm((num_cam, 1, spatial_dim)),
        ))
    for _ in range(vam_depth):
        params["vam"].append(dict(
            ln1_g=1.0 + nrm((C, 1)), ln1_b=nrm((C, 1)),
            wqkv=nrm((3 * inner, C)),       # to_qkv.weight, rows head-major (h*dim_head + d)
            wo=nrm((C, inner)), bo=nrm((C, 1)),
            ln2_g=1.0 + nrm((C, 1)), ln2_b=nrm((C, 1)),
            ff_w1=nrm((mlp_dim, C)), ff_b1=nrm((mlp_dim, 1)),
            ff_w2=nrm((C, mlp_dim)), ff_b2=nrm((C, 1)),
        ))
    return params


def prepare_params(params, *, spatial_pad):
    heads, dim_head = params["heads"], params["dim_head"]
    inner = heads * dim_head
    pad = spatial_pad - params["spatial_dim"]
    prep = {"heads": heads, "dim_head": dim_head, "spatial_pad": spatial_pad,
            "vpm": [], "vam": []}
    for layer in params["vpm"]:
        # Zero-padded rows/cols keep the padded spatial positions exactly zero.
        w1 = jnp.pad(layer["w1"], ((0, 0), (0, pad), (0, 0))).astype(jnp.bfloat16)
        w2 = jnp.pad(layer["w2"], ((0, 0), (0, 0), (0, pad))).astype(jnp.bfloat16)
        b2 = jnp.pad(layer["b2"], ((0, 0), (0, 0), (0, pad)))
        prep["vpm"].append((w1, layer["b1"], w2, b2))
    # Fold the attention scale into the q rows of wqkv (one-time weight transform).
    scale = jnp.concatenate([jnp.full((inner, 1), dim_head ** -0.5, jnp.float32),
                             jnp.ones((2 * inner, 1), jnp.float32)], axis=0)
    for vp in params["vam"]:
        prep["vam"].append(dict(
            ln1_g=vp["ln1_g"], ln1_b=vp["ln1_b"],
            wqkv=(vp["wqkv"] * scale).astype(jnp.bfloat16),
            wo=vp["wo"].astype(jnp.bfloat16), bo=vp["bo"],
            ln2_g=vp["ln2_g"], ln2_b=vp["ln2_b"],
            ff_w1=vp["ff_w1"].astype(jnp.bfloat16), ff_b1=vp["ff_b1"],
            ff_w2=vp["ff_w2"].astype(jnp.bfloat16), ff_b2=vp["ff_b2"],
        ))
    return prep


if __name__ == "__main__":
    # Small, module-consistent config.
    B, L, M, C, H, W = 1, 2, 3, 4, 4, 4      # M = num_cam, C = args['dim']
    spatial_dim = H * W                      # args['vpm']['dim']
    hidden_dim = 32                          # args['vpm']['hidden_dim']
    vpm_depth = 2                            # args['vpm']['depth']
    heads, dim_head = 2, 8                   # args['vam']
    vam_depth = 2                            # args['vam']['depth']
    mlp_dim = 8                              # args['feed_forward']['mlp_dim']

    key = jax.random.PRNGKey(0)
    kx, kp = jax.random.split(key)
    x = jax.random.normal(kx, (B, L, M, C, H, W), dtype=jnp.float32)
    params = init_params(kp, input_dim=C, spatial_dim=spatial_dim, hidden_dim=hidden_dim,
                         num_cam=M, vpm_depth=vpm_depth, heads=heads, dim_head=dim_head,
                         vam_depth=vam_depth, mlp_dim=mlp_dim)
    prepared = prepare_params(params, spatial_pad=_round_up(spatial_dim, 128))

    out = view_transfer_forward(x, prepared)
    out = jax.block_until_ready(out)
    assert out.shape == (B, L, C, H, W), out.shape
    assert bool(jnp.all(jnp.isfinite(out)))
    print("KERNEL_OK")
</pallas_src>

<mosaic_0001>
module attributes {stable_mosaic.version = 11 : i64} {
  func.func @_vpm_kernel(%arg0: i32, %arg1: i32, %arg2: i32, %arg3: memref<1x1x4x128xf32, #tpu.memory_space<vmem>>, %arg4: memref<1x128x32xbf16, #tpu.memory_space<vmem>>, %arg5: memref<1x1x32xf32, #tpu.memory_space<vmem>>, %arg6: memref<1x32x128xbf16, #tpu.memory_space<vmem>>, %arg7: memref<1x1x128xf32, #tpu.memory_space<vmem>>, %arg8: memref<1x1x4x128xbf16, #tpu.memory_space<vmem>>) attributes {dimension_semantics = [#tpu.dimension_semantics<parallel>, #tpu.dimension_semantics<parallel>, #tpu.dimension_semantics<parallel>], iteration_bounds = array<i64: 3, 2, 1>, scalar_prefetch = 0 : i64, scratch_operands = 0 : i64, tpu.core_type = #tpu.core_type<tc>, window_params = [{transform_indices = @transform_0, window_bounds = array<i64: 1, 1, 4, 128>}, {pipeline_mode = #tpu.pipeline_mode<synchronous>, transform_indices = @transform_1, window_bounds = array<i64: 1, 128, 32>}, {transform_indices = @transform_2, window_bounds = array<i64: 1, 1, 32>}, {pipeline_mode = #tpu.pipeline_mode<synchronous>, transform_indices = @transform_3, window_bounds = array<i64: 1, 32, 128>}, {transform_indices = @transform_4, window_bounds = array<i64: 1, 1, 128>}, {transform_indices = @transform_5, window_bounds = array<i64: 1, 1, 4, 128>}]} {
    %c0 = arith.constant 0 : index
    %c0_0 = arith.constant 0 : index
    %c0_1 = arith.constant 0 : index
    %c0_2 = arith.constant 0 : index
    %0 = vector.load %arg3[%c0, %c0_0, %c0_1, %c0_2] : memref<1x1x4x128xf32, #tpu.memory_space<vmem>>, vector<1x1x4x128xf32>
    %1 = vector.shape_cast %0 : vector<1x1x4x128xf32> to vector<4x128xf32>
    %2 = arith.truncf %1 : vector<4x128xf32> to vector<4x128xbf16>
    %c0_3 = arith.constant 0 : index
    %c0_4 = arith.constant 0 : index
    %c0_5 = arith.constant 0 : index
    %3 = vector.load %arg4[%c0_3, %c0_4, %c0_5] : memref<1x128x32xbf16, #tpu.memory_space<vmem>>, vector<1x128x32xbf16>
    %4 = vector.shape_cast %3 : vector<1x128x32xbf16> to vector<128x32xbf16>
    %cst = arith.constant dense<0.000000e+00> : vector<4x32xf32>
    %5 = tpu.matmul %2, %4, %cst {dimension_numbers = #tpu.dot_dimension_numbers<[1], [0], [0], [1], [0, 0, 1, 1], [], []>} : vector<4x128xbf16>, vector<128x32xbf16>, vector<4x32xf32> -> vector<4x32xf32>
    %c0_6 = arith.constant 0 : index
    %c0_7 = arith.constant 0 : index
    %c0_8 = arith.constant 0 : index
    %6 = vector.load %arg5[%c0_6, %c0_7, %c0_8] : memref<1x1x32xf32, #tpu.memory_space<vmem>>, vector<1x1x32xf32>
    %7 = vector.shape_cast %6 : vector<1x1x32xf32> to vector<1x32xf32>
    %8 = vector.broadcast %7 : vector<1x32xf32> to vector<4x32xf32>
    %9 = arith.addf %5, %8 : vector<4x32xf32>
    %10 = arith.mulf %9, %9 : vector<4x32xf32>
    %11 = arith.mulf %9, %10 : vector<4x32xf32>
    %cst_9 = arith.constant 4.471500e-02 : f32
    %12 = vector.broadcast %cst_9 : f32 to vector<4x32xf32>
    %13 = arith.mulf %12, %11 : vector<4x32xf32>
    %14 = arith.addf %9, %13 : vector<4x32xf32>
    %cst_10 = arith.constant 0.797884583 : f32
    %15 = vector.broadcast %cst_10 : f32 to vector<4x32xf32>
    %16 = arith.mulf %15, %14 : vector<4x32xf32>
    %17 = math.tanh %16 : vector<4x32xf32>
    %cst_11 = arith.constant 1.000000e+00 : f32
    %18 = vector.broadcast %cst_11 : f32 to vector<4x32xf32>
    %19 = arith.addf %18, %17 : vector<4x32xf32>
    %cst_12 = arith.constant 5.000000e-01 : f32
    %20 = vector.broadcast %cst_12 : f32 to vector<4x32xf32>
    %21 = arith.mulf %20, %19 : vector<4x32xf32>
    %22 = arith.mulf %9, %21 : vector<4x32xf32>
    %23 = arith.truncf %22 : vector<4x32xf32> to vector<4x32xbf16>
    %c0_13 = arith.constant 0 : index
    %c0_14 = arith.constant 0 : index
    %c0_15 = arith.constant 0 : index
    %24 = vector.load %arg6[%c0_13, %c0_14, %c0_15] : memref<1x32x128xbf16, #tpu.memory_space<vmem>>, vector<1x32x128xbf16>
    %25 = vector.shape_cast %24 : vector<1x32x128xbf16> to vector<32x128xbf16>
    %cst_16 = arith.constant dense<0.000000e+00> : vector<4x128xf32>
    %26 = tpu.matmul %23, %25, %cst_16 {dimension_numbers = #tpu.dot_dimension_numbers<[1], [0], [0], [1], [0, 0, 1, 1], [], []>} : vector<4x32xbf16>, vector<32x128xbf16>, vector<4x128xf32> -> vector<4x128xf32>
    %c0_17 = arith.constant 0 : index
    %c0_18 = arith.constant 0 : index
    %c0_19 = arith.constant 0 : index
    %27 = vector.load %arg7[%c0_17, %c0_18, %c0_19] : memref<1x1x128xf32, #tpu.memory_space<vmem>>, vector<1x1x128xf32>
    %28 = vector.shape_cast %27 : vector<1x1x128xf32> to vector<1x128xf32>
    %29 = vector.broadcast %28 : vector<1x128xf32> to vector<4x128xf32>
    %30 = arith.addf %26, %29 : vector<4x128xf32>
    %31 = arith.truncf %30 : vector<4x128xf32> to vector<4x128xbf16>
    %c0_20 = arith.constant 0 : index
    %c0_21 = arith.constant 0 : index
    %c0_22 = arith.constant 0 : index
    %c0_23 = arith.constant 0 : index
    %32 = vector.load %arg8[%c0_20, %c0_21, %c0_22, %c0_23] : memref<1x1x4x128xbf16, #tpu.memory_space<vmem>>, vector<1x1x4x128xbf16>
    %33 = vector.shape_cast %32 : vector<1x1x4x128xbf16> to vector<4x128xbf16>
    %34 = vector.shape_cast %31 : vector<4x128xbf16> to vector<1x1x4x128xbf16>
    tpu.vector_store %arg8[%c0_20, %c0_21, %c0_22, %c0_23], %34 {strides = array<i32>} : memref<1x1x4x128xbf16, #tpu.memory_space<vmem>>, vector<1x1x4x128xbf16>,
    return
  }
  func.func @transform_0(%arg0: i32, %arg1: i32, %arg2: i32) -> (i32, i32, i32, i32) {
    %c0_i32 = arith.constant 0 : i32
    %c0_i32_0 = arith.constant 0 : i32
    return %arg1, %arg0, %arg2, %c0_i32 : i32, i32, i32, i32
  }
  func.func @transform_1(%arg0: i32, %arg1: i32, %arg2: i32) -> (i32, i32, i32) {
    %c0_i32 = arith.constant 0 : i32
    %c0_i32_0 = arith.constant 0 : i32
    %c0_i32_1 = arith.constant 0 : i32
    return %arg0, %c0_i32, %c0_i32_0 : i32, i32, i32
  }
  func.func @transform_2(%arg0: i32, %arg1: i32, %arg2: i32) -> (i32, i32, i32) {
    %c0_i32 = arith.constant 0 : i32
    %c0_i32_0 = arith.constant 0 : i32
    %c0_i32_1 = arith.constant 0 : i32
    return %arg0, %c0_i32, %c0_i32_0 : i32, i32, i32
  }
  func.func @transform_3(%arg0: i32, %arg1: i32, %arg2: i32) -> (i32, i32, i32) {
    %c0_i32 = arith.constant 0 : i32
    %c0_i32_0 = arith.constant 0 : i32
    %c0_i32_1 = arith.constant 0 : i32
    return %arg0, %c0_i32, %c0_i32_0 : i32, i32, i32
  }
  func.func @transform_4(%arg0: i32, %arg1: i32, %arg2: i32) -> (i32, i32, i32) {
    %c0_i32 = arith.constant 0 : i32
    %c0_i32_0 = arith.constant 0 : i32
    %c0_i32_1 = arith.constant 0 : i32
    return %arg0, %c0_i32, %c0_i32_0 : i32, i32, i32
  }
  func.func @transform_5(%arg0: i32, %arg1: i32, %arg2: i32) -> (i32, i32, i32, i32) {
    %c0_i32 = arith.constant 0 : i32
    %c0_i32_0 = arith.constant 0 : i32
    return %arg1, %arg0, %arg2, %c0_i32 : i32, i32, i32, i32
  }
}

</mosaic_0001>

<llo_original>
// kernel: tpu_custom_call.1
$region0: #{tpu_custom_call.1}
  #allocation0 [shape = 'u32[]', space=smem, size = 0x4, offset = 0x4, fixed_abs, tag = 'smem constant byte address 0x4 - core index']
  #allocation1 [shape = 'u32[144,128]{1,0:T(1,128)}', space=vmem, size = 0x12000, scoped, tag = 'internal scratch']
  %s0 = inlined_call_operand.vmem [shape: f32[2,3,4,128], index: 0, kind: input, shape index: {}]
  %s1 = inlined_call_operand.vmem [shape: bf16[3,128,32], index: 1, kind: input, shape index: {}]
  %s2 = inlined_call_operand.vmem [shape: f32[3,1,32], index: 2, kind: input, shape index: {}]
  %s3 = inlined_call_operand.vmem [shape: bf16[3,32,128], index: 3, kind: input, shape index: {}]
  %s4 = inlined_call_operand.vmem [shape: f32[3,1,128], index: 4, kind: input, shape index: {}]
  %s5 = inlined_call_operand.hbm [shape: bf16[2,3,4,128], index: 5, kind: output, shape index: {}]
  %s6 = sld [smem:[#allocation0]]
  $region53: #{tpu_custom_call.1} parent=0
    _
  %s8 = ssub.s32 1, %s6
  %s9 = scalar_select 0, %s8, %s6
  $region1: #{tpu_custom_call.1} parent=0
    #allocation2 [shape = 'u8[2048]{0}', space=vmem, size = 0x800, scoped, tag = 'output window, operand 0']
    #allocation3 [shape = 's32[2]{0}', space=sflag, size = 0x8, scoped, tag = 'scoped memory for tpu_custom_call.1']
    %10 = vsyncpa [#allocation3], 0
    %s11 = scalar_lea.sflag [#allocation3], 1
    %12 = vsyncpa %s11, 0
    loop: start=0, step=1, limit=8
    $region2: #{tpu_custom_call.1} parent=1 // loop_pre_header
      _
    $region3: #{tpu_custom_call.1} parent=1 // loop_header
      %s14 = sphi 0, %s18
      %p15 = scmp.ge.s32.totalorder %s14, 8
      %s21 = sphi 0, %s40
      %s22 = sphi 0, %s36
      %s23 = sphi 0, %s32
      %s24 = sphi 0, %s21
      %s25 = sphi 0, %s22
      %s26 = sphi 0, %s23
      %s27 = sphi 0, %s24
      %s28 = sphi 0, %s25
      %s29 = sphi 0, %s26
      %s47 = sphi 0, %s49
      %s50 = sphi 0, %s47
      %s51 = sphi 0, %s50
      %s67 = sphi 0, %s51
      %s73 = sphi 0, %s75
      %s76 = sphi 0, %s73
      %s77 = sphi 0, %s76
      %s93 = sphi 0, %s77
      %s99 = sphi 0, %s101
      %s102 = sphi 0, %s99
      %s103 = sphi 0, %s102
      %s119 = sphi 0, %s103
      %s125 = sphi 0, %s127
      %s128 = sphi 0, %s125
      %s129 = sphi 0, %s128
      %s145 = sphi 0, %s129
      %s151 = sphi 0, %s153
      %s154 = sphi 0, %s151
      %s155 = sphi 0, %s154
      %s171 = sphi 0, %s155
      %s181 = sphi 0, %s183
      %s184 = sphi 0, %s181
      %s185 = sphi 0, %s184
      %s201 = sphi 0, %s185
    $region4: #{tpu_custom_call.1} parent=1 // loop_header_branch
      %17 = sbr.rel (%p15) target = $region8
    $region5: #{tpu_custom_call.1} parent=1 // loop_body
      %s19 = ssub.s32 %s14, 1
      %s20 = ssub.s32 %s14, 2
      %s30 = sadd.s32 1, %s23
      %p31 = scmp.ge.s32.totalorder %s30, 1
      %s32 = scalar_select %p31, 0, %s30
      %s33 = sadd.s32 1, %s22
      %s34 = scalar_select %p31, %s33, %s22
      %p35 = scmp.ge.s32.totalorder %s34, 2
      %s36 = scalar_select %p35, 0, %s34
      %s37 = sadd.s32 1, %s21
      %s38 = scalar_select %p35, %s37, %s21
      %p39 = scmp.ge.s32.totalorder %s38, 3
      %s40 = scalar_select %p39, 0, %s38
      %s41 = ssub.s32 %s22, %s36
      %s42 = ssub.s32 %s21, %s40
      %s43 = sor.u32 %s41, %s42
      %s44 = ssub.s32 %s23, %s32
      %s45 = sor.u32 %s43, %s44
      %p46 = scmp.eq.s32.totalorder %s45, 0
      %s48 = sadd.s32 %s47, 1
      %s49 = scalar_select %p46, %s47, %s48
      %p52 = pneg %p46
      %p53 = scmp.eq.s32.totalorder %s14, 5
      %p54 = por %p52, %p53
      %p55 = scmp.ne.s32.totalorder %s47, %s50
      %p56 = scmp.eq.s32.totalorder %s14, 0
      %p57 = por %p55, %p56
      %p58 = scmp.ne.s32.totalorder %s47, %s50
      %p59 = scmp.eq.s32.totalorder %s19, 5
      %p60 = por %p58, %p59
      %p61 = scmp.ne.s32.totalorder %s50, %s51
      %p62 = scmp.eq.s32.totalorder %s19, 0
      %p63 = por %p61, %p62
      %p64 = scmp.ne.s32.totalorder %s50, %s51
      %p65 = scmp.eq.s32.totalorder %s20, 5
      %p66 = por %p64, %p65
      %p68 = scmp.ne.s32.totalorder %s51, %s67
      %p69 = scmp.eq.s32.totalorder %s20, 0
      %p70 = por %p68, %p69
      %s71 = ssub.s32 %s21, %s40
      %p72 = scmp.eq.s32.totalorder %s71, 0
      %s74 = sadd.s32 %s73, 1
      %s75 = scalar_select %p72, %s73, %s74
      %p78 = pneg %p72
      %p79 = scmp.eq.s32.totalorder %s14, 5
      %p80 = por %p78, %p79
      %p81 = scmp.ne.s32.totalorder %s73, %s76
      %p82 = scmp.eq.s32.totalorder %s14, 0
      %p83 = por %p81, %p82
      %p84 = scmp.ne.s32.totalorder %s73, %s76
      %p85 = scmp.eq.s32.totalorder %s19, 5
      %p86 = por %p84, %p85
      %p87 = scmp.ne.s32.totalorder %s76, %s77
      %p88 = scmp.eq.s32.totalorder %s19, 0
      %p89 = por %p87, %p88
      %p90 = scmp.ne.s32.totalorder %s76, %s77
      %p91 = scmp.eq.s32.totalorder %s20, 5
      %p92 = por %p90, %p91
      %p94 = scmp.ne.s32.totalorder %s77, %s93
      %p95 = scmp.eq.s32.totalorder %s20, 0
      %p96 = por %p94, %p95
      %s97 = ssub.s32 %s21, %s40
      %p98 = scmp.eq.s32.totalorder %s97, 0
      %s100 = sadd.s32 %s99, 1
      %s101 = scalar_select %p98, %s99, %s100
      %p104 = pneg %p98
      %p105 = scmp.eq.s32.totalorder %s14, 5
      %p106 = por %p104, %p105
      %p107 = scmp.ne.s32.totalorder %s99, %s102
      %p108 = scmp.eq.s32.totalorder %s14, 0
      %p109 = por %p107, %p108
      %p110 = scmp.ne.s32.totalorder %s99, %s102
      %p111 = scmp.eq.s32.totalorder %s19, 5
      %p112 = por %p110, %p111
      %p113 = scmp.ne.s32.totalorder %s102, %s103
      %p114 = scmp.eq.s32.totalorder %s19, 0
      %p115 = por %p113, %p114
      %p116 = scmp.ne.s32.totalorder %s102, %s103
      %p117 = scmp.eq.s32.totalorder %s20, 5
      %p118 = por %p116, %p117
      %p120 = scmp.ne.s32.totalorder %s103, %s119
      %p121 = scmp.eq.s32.totalorder %s20, 0
      %p122 = por %p120, %p121
      %s123 = ssub.s32 %s21, %s40
      %p124 = scmp.eq.s32.totalorder %s123, 0
      %s126 = sadd.s32 %s125, 1
      %s127 = scalar_select %p124, %s125, %s126
      %p130 = pneg %p124
      %p131 = scmp.eq.s32.totalorder %s14, 5
      %p132 = por %p130, %p131
      %p133 = scmp.ne.s32.totalorder %s125, %s128
      %p134 = scmp.eq.s32.totalorder %s14, 0
      %p135 = por %p133, %p134
      %p136 = scmp.ne.s32.totalorder %s125, %s128
      %p137 = scmp.eq.s32.totalorder %s19, 5
      %p138 = por %p136, %p137
      %p139 = scmp.ne.s32.totalorder %s128, %s129
      %p140 = scmp.eq.s32.totalorder %s19, 0
      %p141 = por %p139, %p140
      %p142 = scmp.ne.s32.totalorder %s128, %s129
      %p143 = scmp.eq.s32.totalorder %s20, 5
      %p144 = por %p142, %p143
      %p146 = scmp.ne.s32.totalorder %s129, %s145
      %p147 = scmp.eq.s32.totalorder %s20, 0
      %p148 = por %p146, %p147
      %s149 = ssub.s32 %s21, %s40
      %p150 = scmp.eq.s32.totalorder %s149, 0
      %s152 = sadd.s32 %s151, 1
      %s153 = scalar_select %p150, %s151, %s152
      %p156 = pneg %p150
      %p157 = scmp.eq.s32.totalorder %s14, 5
      %p158 = por %p156, %p157
      %p159 = scmp.ne.s32.totalorder %s151, %s154
      %p160 = scmp.eq.s32.totalorder %s14, 0
      %p161 = por %p159, %p160
      %p162 = scmp.ne.s32.totalorder %s151, %s154
      %p163 = scmp.eq.s32.totalorder %s19, 5
      %p164 = por %p162, %p163
      %p165 = scmp.ne.s32.totalorder %s154, %s155
      %p166 = scmp.eq.s32.totalorder %s19, 0
      %p167 = por %p165, %p166
      %p168 = scmp.ne.s32.totalorder %s154, %s155
      %p169 = scmp.eq.s32.totalorder %s20, 5
      %p170 = por %p168, %p169
      %p172 = scmp.ne.s32.totalorder %s155, %s171
      %p173 = scmp.eq.s32.totalorder %s20, 0
      %p174 = por %p172, %p173
      %s175 = ssub.s32 %s22, %s36
      %s176 = ssub.s32 %s21, %s40
      %s177 = sor.u32 %s175, %s176
      %s178 = ssub.s32 %s23, %s32
      %s179 = sor.u32 %s177, %s178
      %p180 = scmp.eq.s32.totalorder %s179, 0
      %s182 = sadd.s32 %s181, 1
      %s183 = scalar_select %p180, %s181, %s182
      %p186 = pneg %p180
      %p187 = scmp.eq.s32.totalorder %s14, 5
      %p188 = por %p186, %p187
      %p189 = scmp.ne.s32.totalorder %s181, %s184
      %p190 = scmp.eq.s32.totalorder %s14, 0
      %p191 = por %p189, %p190
      %p192 = scmp.ne.s32.totalorder %s181, %s184
      %p193 = scmp.eq.s32.totalorder %s19, 5
      %p194 = por %p192, %p193
      %p195 = scmp.ne.s32.totalorder %s184, %s185
      %p196 = scmp.eq.s32.totalorder %s19, 0
      %p197 = por %p195, %p196
      %p198 = scmp.ne.s32.totalorder %s184, %s185
      %p199 = scmp.eq.s32.totalorder %s20, 5
      %p200 = por %p198, %p199
      %p202 = scmp.ne.s32.totalorder %s185, %s201
      %p203 = scmp.eq.s32.totalorder %s20, 0
      %p204 = por %p202, %p203
      %p205 = scmp.le.s32.totalorder 1, %s14
      %p206 = scmp.lt.s32.totalorder %s14, 7
      %p207 = pnand %p205, %p206
      %p208 = pneg %p207
      // Predicated region
      $region9: #{tpu_custom_call.1} parent=5 // pred_check
        _
      $region10: #{tpu_custom_call.1} parent=5 // pred_check_branch
        %210 = sbr.rel (%p207) target = $region12
      $region11: #{tpu_custom_call.1} parent=5 // pred_region
        %s211 = ssub.s32 %s14, 1
        // Predicated region
        $region13: #{tpu_custom_call.1} parent=11 // pred_check
          %p212 = pneg %p89
        $region14: #{tpu_custom_call.1} parent=11 // pred_check_branch
          %214 = sbr.rel (%p212) target = $region16
        $region15: #{tpu_custom_call.1} parent=11 // pred_region
          %p215 = scmp.lt.s32.totalorder %s24, 2
          %s216 = scalar_select %p215, %s24, 2
          %s217 = smul.addr %s216, 16
          %s218 = smul.addr %s217, 4
          %s219 = scalar_lea.vmem %s1, %s218
        $region16: #{tpu_custom_call.1} parent=11 // pred_fallthru
          _
        // Predicated region
        $region17: #{tpu_custom_call.1} parent=11 // pred_check
          %p220 = pneg %p141
        $region18: #{tpu_custom_call.1} parent=11 // pred_check_branch
          %222 = sbr.rel (%p220) target = $region20
        $region19: #{tpu_custom_call.1} parent=11 // pred_region
          %p223 = scmp.lt.s32.totalorder %s24, 2
          %s224 = scalar_select %p223, %s24, 2
          %s225 = smul.addr %s224, 4
          %s226 = smul.addr %s225, 4
          %s227 = scalar_lea.vmem %s3, %s226
        $region20: #{tpu_custom_call.1} parent=11 // pred_fallthru
          _
      $region12: #{tpu_custom_call.1} parent=5 // pred_fallthru
        _
      %p228 = scmp.lt.s32.totalorder %s14, 6
      // Predicated region
      $region21: #{tpu_custom_call.1} parent=5 // pred_check
        %p229 = pneg %p228
      $region22: #{tpu_custom_call.1} parent=5 // pred_check_branch
        %231 = sbr.rel (%p229) target = $region24
      $region23: #{tpu_custom_call.1} parent=5 // pred_region
        // Predicated region
        $region25: #{tpu_custom_call.1} parent=23 // pred_check
          %p232 = pneg %p57
        $region26: #{tpu_custom_call.1} parent=23 // pred_check_branch
          %234 = sbr.rel (%p232) target = $region28
        $region27: #{tpu_custom_call.1} parent=23 // pred_region
          %p235 = scmp.lt.s32.totalorder %s22, 1
          %s236 = scalar_select %p235, %s22, 1
          %p237 = scmp.lt.s32.totalorder %s21, 2
          %s238 = scalar_select %p237, %s21, 2
          %p239 = scmp.lt.s32.totalorder %s23, 0
          %s240 = scalar_select %p239, %s23, 0
          %s241 = sadd.s32 %s240, %s238
          %s242 = smul.addr %s236, 3
          %s243 = sadd.s32 %s241, %s242
          %s244 = smul.addr %s243, 4
          %s245 = scalar_lea.vmem %s0, %s244
        $region28: #{tpu_custom_call.1} parent=23 // pred_fallthru
          _
        // Predicated region
        $region29: #{tpu_custom_call.1} parent=23 // pred_check
          %p246 = pneg %p109
        $region30: #{tpu_custom_call.1} parent=23 // pred_check_branch
          %248 = sbr.rel (%p246) target = $region32
        $region31: #{tpu_custom_call.1} parent=23 // pred_region
          %p249 = scmp.lt.s32.totalorder %s21, 2
          %s250 = scalar_select %p249, %s21, 2
          %s251 = scalar_lea.vmem %s2, %s250
        $region32: #{tpu_custom_call.1} parent=23 // pred_fallthru
          _
        // Predicated region
        $region33: #{tpu_custom_call.1} parent=23 // pred_check
          %p252 = pneg %p161
        $region34: #{tpu_custom_call.1} parent=23 // pred_check_branch
          %254 = sbr.rel (%p252) target = $region36
        $region35: #{tpu_custom_call.1} parent=23 // pred_region
          %p255 = scmp.lt.s32.totalorder %s21, 2
          %s256 = scalar_select %p255, %s21, 2
          %s257 = scalar_lea.vmem %s4, %s256
        $region36: #{tpu_custom_call.1} parent=23 // pred_fallthru
          _
      $region24: #{tpu_custom_call.1} parent=5 // pred_fallthru
        _
      %p258 = scmp.le.s32.totalorder 1, %s14
      %p259 = scmp.lt.s32.totalorder %s14, 7
      %p260 = pnand %p258, %p259
      %p261 = pneg %p260
      // Predicated region
      $region37: #{tpu_custom_call.1} parent=5 // pred_check
        _
      $region38: #{tpu_custom_call.1} parent=5 // pred_check_branch
        %263 = sbr.rel (%p260) target = $region40
      $region39: #{tpu_custom_call.1} parent=5 // pred_region
        %s264 = ssub.s32 %s14, 1
        %p265 = scmp.lt.s32.totalorder %s25, 1
        %s266 = scalar_select %p265, %s25, 1
        %p267 = scmp.lt.s32.totalorder %s24, 2
        %s268 = scalar_select %p267, %s24, 2
        %p269 = scmp.lt.s32.totalorder %s26, 0
        %s270 = scalar_select %p269, %s26, 0
        %s271 = sadd.s32 %s270, %s268
        %s272 = smul.addr %s266, 3
        %s273 = sadd.s32 %s271, %s272
        %s274 = smul.addr %s273, 4
        %s275 = scalar_lea.vmem %s0, %s274
        %p276 = pneg %p63
        %p277 = pneg %p60
        %p278 = scmp.lt.s32.totalorder %s24, 2
        %s279 = scalar_select %p278, %s24, 2
        %s280 = smul.addr %s279, 16
        %s281 = smul.addr %s280, 4
        %s282 = scalar_lea.vmem %s1, %s281
        %p283 = pneg %p89
        %p284 = pneg %p86
        %p285 = scmp.lt.s32.totalorder %s24, 2
        %s286 = scalar_select %p285, %s24, 2
        %s287 = scalar_lea.vmem %s2, %s286
        %p288 = pneg %p115
        %p289 = pneg %p112
        %p290 = scmp.lt.s32.totalorder %s24, 2
        %s291 = scalar_select %p290, %s24, 2
        %s292 = smul.addr %s291, 4
        %s293 = smul.addr %s292, 4
        %s294 = scalar_lea.vmem %s3, %s293
        %p295 = pneg %p141
        %p296 = pneg %p138
        %p297 = scmp.lt.s32.totalorder %s24, 2
        %s298 = scalar_select %p297, %s24, 2
        %s299 = scalar_lea.vmem %s4, %s298
        %p300 = pneg %p167
        %p301 = pneg %p164
        %p302 = pneg %p197
        %p303 = pneg %p194
        %s304 = sand.u32 %s184, 1
        %s305 = scalar_lea.sflag [#allocation3], %s304
        %s306 = sand.u32 %s184, 1
        %s307 = smul.addr %s306, 2
        %s308 = scalar_lea.vmem [#allocation2], %s307
        %p309 = scmp.lt.s32.totalorder %s25, 1
        %s310 = scalar_select %p309, %s25, 1
        %p311 = scmp.lt.s32.totalorder %s24, 2
        %s312 = scalar_select %p311, %s24, 2
        %p313 = scmp.lt.s32.totalorder %s26, 0
        %s314 = scalar_select %p313, %s26, 0
        %s315 = sadd.s32 %s314, %s312
        %s316 = smul.addr %s310, 3
        %s317 = sadd.s32 %s315, %s316
        %s318 = smul.addr %s317, 4
        %s319 = scalar_lea.vmem %s0, %s318
        %p320 = scmp.lt.s32.totalorder %s24, 2
        %s321 = scalar_select %p320, %s24, 2
        %s322 = smul.addr %s321, 16
        %s323 = smul.addr %s322, 4
        %s324 = scalar_lea.vmem %s1, %s323
        %p325 = scmp.lt.s32.totalorder %s24, 2
        %s326 = scalar_select %p325, %s24, 2
        %s327 = scalar_lea.vmem %s2, %s326
        %p328 = scmp.lt.s32.totalorder %s24, 2
        %s329 = scalar_select %p328, %s24, 2
        %s330 = smul.addr %s329, 4
        %s331 = smul.addr %s330, 4
        %s332 = scalar_lea.vmem %s3, %s331
        %p333 = scmp.lt.s32.totalorder %s24, 2
        %s334 = scalar_select %p333, %s24, 2
        %s335 = scalar_lea.vmem %s4, %s334
        %v337 = vld [vmem:[%s319] sm:$0xf]
        %v338 = vpack.c.bf16 %v337, %v337
        %v339 = vld [vmem:[%s324] sm:$0xf]
        %v340 = vld [vmem:[%s324 + $0x4] sm:$0xf]
        %v341 = vld [vmem:[%s324 + $0x8] sm:$0xf]
        %v342 = vld [vmem:[%s324 + $0xc] sm:$0xf]
        %v343 = vld [vmem:[%s324 + $0x10] sm:$0xf]
        %v344 = vld [vmem:[%s324 + $0x14] sm:$0xf]
        %v345 = vld [vmem:[%s324 + $0x18] sm:$0xf]
        %v346 = vld [vmem:[%s324 + $0x1c] sm:$0xf]
        %v347 = vld [vmem:[%s324 + $0x20] sm:$0xf]
        %v348 = vld [vmem:[%s324 + $0x24] sm:$0xf]
        %v349 = vld [vmem:[%s324 + $0x28] sm:$0xf]
        %v350 = vld [vmem:[%s324 + $0x2c] sm:$0xf]
        %v351 = vld [vmem:[%s324 + $0x30] sm:$0xf]
        %v352 = vld [vmem:[%s324 + $0x34] sm:$0xf]
        %v353 = vld [vmem:[%s324 + $0x38] sm:$0xf]
        %v354 = vld [vmem:[%s324 + $0x3c] sm:$0xf]
        %v355 = vld [vmem:[%s327] sm:$0x1]
        %v357 = vlaneseq
        %v358 = vshrl.u32 %v357, 7
        %v359 = vsub.s32 0, %v358
        %v360 = vrot.slane %v355, %v359
        %v378 = vunpack.c.l.b16 %v339
        %v379 = vunpack.c.l.b16 %v340
        %v380 = vunpack.c.l.b16 %v341
        %v381 = vunpack.c.l.b16 %v342
        %v382 = vunpack.c.l.b16 %v343
        %v383 = vunpack.c.l.b16 %v344
        %v384 = vunpack.c.l.b16 %v345
        %v385 = vunpack.c.l.b16 %v346
        %v386 = vunpack.c.l.b16 %v347
        %v387 = vunpack.c.l.b16 %v348
        %v388 = vunpack.c.l.b16 %v349
        %v389 = vunpack.c.l.b16 %v350
        %v390 = vunpack.c.l.b16 %v351
        %v391 = vunpack.c.l.b16 %v352
        %v392 = vunpack.c.l.b16 %v353
        %v393 = vunpack.c.l.b16 %v354
        %v394 = vpack.c.b16 %v379, %v378
        %v395 = vpack.c.b16 %v381, %v380
        %v396 = vpack.c.b16 %v383, %v382
        %v397 = vpack.c.b16 %v385, %v384
        %v398 = vpack.c.b16 %v387, %v386
        %v399 = vpack.c.b16 %v389, %v388
        %v400 = vpack.c.b16 %v391, %v390
        %v401 = vpack.c.b16 %v393, %v392
        %410 = vmatprep.subr.bf16.mxu0 0
        %411 = vmatpush1.bf16.msra.mxu0 %v401
        %412 = vmatprep.subr.bf16.mxu0 0
        %413 = vmatpush1.bf16.msra.mxu0 %v400
        %414 = vmatprep.subr.bf16.mxu0 0
        %415 = vmatpush1.bf16.msra.mxu0 %v399
        %416 = vmatprep.subr.bf16.mxu0 0
        %417 = vmatpush1.bf16.msra.mxu0 %v398
        %418 = vmatprep.subr.bf16.mxu0 0
        %419 = vmatpush1.bf16.msra.mxu0 %v397
        %420 = vmatprep.subr.bf16.mxu0 0
        %421 = vmatpush1.bf16.msra.mxu0 %v396
        %422 = vmatprep.subr.bf16.mxu0 0
        %423 = vmatpush1.bf16.msra.mxu0 %v395
        %424 = vmatprep.subr.bf16.mxu0 0
        %425 = vmatpush1.bf16.msra.mxu0 %v394
        %426 = vmatprep.subr.bf16.mxu0 0
        %427 = vmatpush2.bf16.msra.mxu0 0
        %428 = vmatprep.subr.bf16.mxu0 0
        %429 = vmatpush2.bf16.msra.mxu0 0
        %430 = vmatprep.subr.bf16.mxu0 0
        %431 = vmatpush2.bf16.msra.mxu0 0
        %432 = vmatprep.subr.bf16.mxu0 0
        %433 = vmatpush2.bf16.msra.mxu0 0
        %434 = vmatprep.subr.bf16.mxu0 0
        %435 = vmatpush2.bf16.msra.mxu0 0
        %436 = vmatprep.subr.bf16.mxu0 0
        %437 = vmatpush2.bf16.msra.mxu0 0
        %438 = vmatprep.subr.bf16.mxu0 0
        %439 = vmatpush2.bf16.msra.mxu0 0
        %440 = vmatprep.subr.bf16.mxu0 0
        %441 = vmatpush2.bf16.msra.mxu0 0
        %442 = vmatprep.mubr.bf16.mxu0 0
        %443 = vmatmul.mubr.bf16.gmra.mxu0 %v338
        %v444 = vpop.f32.mrf.mxu0
        %v445 = vadd.f32 %v360, %v444
        %v446 = vpop.f32.mrf.mxu0
        %v447 = vpop.f32.mrf.mxu0
        %v448 = vpop.f32.mrf.mxu0
        %449 = vdwg.mxu0
        %v450 = vmul.f32 %v445, %v445
        %v451 = vmul.f32 %v445, %v450
        %v452 = vmul.f32 %v451, 0.044715
        %v453 = vadd.f32 %v445, %v452
        %v454 = vmul.f32 %v453, 0.7978846
        %v455 = vtanh.pop %v454
        %v456 = vadd.f32 %v455, 1.0
        %v457 = vmul.f32 %v456, 0.5
        %v458 = vmul.f32 %v445, %v457
        %v459 = vpack.c.bf16 %v458, %v458
        %v460 = vld [vmem:[%s332] sm:$0xf]
        %v461 = vld [vmem:[%s332 + $0x4] sm:$0xf]
        %v462 = vld [vmem:[%s332 + $0x8] sm:$0xf]
        %v463 = vld [vmem:[%s332 + $0xc] sm:$0xf]
        %v464 = vld [vmem:[%s335] sm:$0x1]
        %v466 = vlaneseq
        %v467 = vshrl.u32 %v466, 7
        %v468 = vsub.s32 0, %v467
        %v469 = vrot.slane %v464, %v468
        %v475 = vunpack.c.l.b16 %v460
        %v476 = vunpack.c.l.b16 %v461
        %v477 = vunpack.c.l.b16 %v462
        %v478 = vunpack.c.l.b16 %v463
        %v479 = vpack.c.b16 %v476, %v475
        %v480 = vpack.c.b16 %v478, %v477
        %vm483 = vcmask 261120
        %v485 = vsel %vm483, %v459, 0
        %487 = vmatprep.subr.bf16.mxu0 0
        %488 = vmatpush1.bf16.msra.mxu0 0
        %489 = vmatprep.subr.bf16.mxu0 0
        %490 = vmatpush1.bf16.msra.mxu0 0
        %491 = vmatprep.subr.bf16.mxu0 0
        %492 = vmatpush1.bf16.msra.mxu0 0
        %493 = vmatprep.subr.bf16.mxu0 0
        %494 = vmatpush1.bf16.msra.mxu0 0
        %495 = vmatprep.subr.bf16.mxu0 0
        %496 = vmatpush1.bf16.msra.mxu0 0
        %497 = vmatprep.subr.bf16.mxu0 0
        %498 = vmatpush1.bf16.msra.mxu0 0
        %499 = vmatprep.subr.bf16.mxu0 0
        %500 = vmatpush1.bf16.msra.mxu0 %v480
        %501 = vmatprep.subr.bf16.mxu0 0
        %502 = vmatpush1.bf16.msra.mxu0 %v479
        %503 = vmatprep.subr.bf16.mxu0 0
        %504 = vmatpush2.bf16.msra.mxu0 0
        %505 = vmatprep.subr.bf16.mxu0 0
        %506 = vmatpush2.bf16.msra.mxu0 0
        %507 = vmatprep.subr.bf16.mxu0 0
        %508 = vmatpush2.bf16.msra.mxu0 0
        %509 = vmatprep.subr.bf16.mxu0 0
        %510 = vmatpush2.bf16.msra.mxu0 0
        %511 = vmatprep.subr.bf16.mxu0 0
        %512 = vmatpush2.bf16.msra.mxu0 0
        %513 = vmatprep.subr.bf16.mxu0 0
        %514 = vmatpush2.bf16.msra.mxu0 0
        %515 = vmatprep.subr.bf16.mxu0 0
        %516 = vmatpush2.bf16.msra.mxu0 0
        %517 = vmatprep.subr.bf16.mxu0 0
        %518 = vmatpush2.bf16.msra.mxu0 0
        %519 = vmatprep.mubr.bf16.mxu0 0
        %520 = vmatmul.mubr.bf16.gmra.mxu0 %v485
        %v521 = vpop.f32.mrf.mxu0
        %v522 = vadd.f32 %v469, %v521
        %v523 = vpop.f32.mrf.mxu0
        %v524 = vpop.f32.mrf.mxu0
        %v525 = vpop.f32.mrf.mxu0
        %526 = vdwg.mxu0
        %v527 = vpack.c.bf16 %v522, %v522
        %528 = vst [vmem:[%s308] sm:$0x3] %v527
        %s529 = sand.u32 %s184, 1
        %s530 = scalar_lea.sflag [#allocation3], %s529
        %s531 = sand.u32 %s184, 1
        %s532 = smul.addr %s531, 2
        %s533 = scalar_lea.vmem [#allocation2], %s532
        // Predicated region
        $region41: #{tpu_custom_call.1} parent=39 // pred_check
          %p534 = pneg %p194
        $region42: #{tpu_custom_call.1} parent=39 // pred_check_branch
          %536 = sbr.rel (%p534) target = $region44
        $region43: #{tpu_custom_call.1} parent=39 // pred_region
          %s538 = ssub.s32 32, 32
          %539 = vsyncadd %s530, %s538
          %s540 = sadd.s32 %s26, %s24
          %s541 = smul.addr %s25, 3
          %s542 = sadd.s32 %s540, %s541
          %s543 = smul.addr %s542, 32
          %s544 = scalar_lea.hbm %s5, %s543
          %s546 = sshll.u32 %s533, 4
          %s547 = int_to_ptr.vmem [resolvable:$true] %s546
          %549 = dma.vmem_to_hbm [thread:$0]  %s547, 32, %s544, %s530
        $region44: #{tpu_custom_call.1} parent=39 // pred_fallthru
          _
      $region40: #{tpu_custom_call.1} parent=5 // pred_fallthru
        _
      %p550 = scmp.le.s32.totalorder 2, %s14
      // Predicated region
      $region45: #{tpu_custom_call.1} parent=5 // pred_check
        %p551 = pneg %p550
      $region46: #{tpu_custom_call.1} parent=5 // pred_check_branch
        %553 = sbr.rel (%p551) target = $region48
      $region47: #{tpu_custom_call.1} parent=5 // pred_region
        %s554 = ssub.s32 %s14, 2
        // Predicated region
        $region49: #{tpu_custom_call.1} parent=47 // pred_check
          %p555 = pneg %p200
        $region50: #{tpu_custom_call.1} parent=47 // pred_check_branch
          %557 = sbr.rel (%p555) target = $region52
        $region51: #{tpu_custom_call.1} parent=47 // pred_region
          %s558 = sand.u32 %s185, 1
          %s559 = scalar_lea.sflag [#allocation3], %s558
          %s560 = sand.u32 %s185, 1
          %s561 = smul.addr %s560, 2
          %s562 = scalar_lea.vmem [#allocation2], %s561
          %563 = dma.done %s559, 32
        $region52: #{tpu_custom_call.1} parent=47 // pred_fallthru
          _
      $region48: #{tpu_custom_call.1} parent=5 // pred_fallthru
        _
    $region6: #{tpu_custom_call.1} parent=1 // loop_footer
      %s18 = sadd.s32 1, %s14
    $region7: #{tpu_custom_call.1} parent=1 // loop_footer_branch
      %13 = sbr.rel target = $region3
    $region8: #{tpu_custom_call.1} parent=1 // loop_exit
      _
    %564 = vsyncpa [#allocation3], 1
    %s565 = scalar_lea.sflag [#allocation3], 1
    %566 = vsyncpa %s565, 1

</llo_original>
